<compile_context>
chip_gen: v5e
topology: v5e:2x2
jax: 0.10.0
libtpu: 0.0.40
codegen_flags: <defaults>
</compile_context>

<pallas_src>
import functools

import jax
import jax.numpy as jnp
from jax.experimental import pallas as pl
from jax.experimental.pallas import tpu as pltpu

TOLERANCE = 1e-8


def _round_up(x, m):
    return ((x + m - 1) // m) * m


def _dftnll_kernel(pred_ref, te_ref, bins_ref, out_ref, *, n_rows):
    """One batch tile: compute sum of log-likelihood over valid rows."""
    i = pl.program_id(0)

    pred = pred_ref[...].astype(jnp.float32)     # (TN, B+1)
    te = te_ref[...]                             # (TN, 2)  [times, indicators]
    bins = bins_ref[...]                         # (3, B+1) [starts, ends, 1/len]

    tn = pred.shape[0]

    t = te[:, 0:1]                               # (TN, 1)
    ind = te[:, 1:2]                             # (TN, 1)
    starts = bins[0:1, :]                        # (1, B+1)
    ends = bins[1:2, :]                          # (1, B+1)
    inv_lens = bins[2:3, :]                      # (1, B+1)

    # _discretize_times: (t > start) & (t <= end); padded column has
    # start = +FLT_MAX so it never matches.
    mask = jnp.logical_and(t > starts, t <= ends).astype(jnp.float32)
    event_lik = jnp.sum(mask * pred, axis=-1, keepdims=True) + TOLERANCE

    # proportion of bin completed: clamp((t - start) * (1/len), 0, 1);
    # padded column has inv_len = 0 -> contributes 0.
    prop = jnp.clip((t - starts) * inv_lens, 0.0, 1.0)
    nonevent_lik = 1.0 - jnp.sum(prop * pred, axis=-1, keepdims=True) + TOLERANCE

    ll = ind * jnp.log(event_lik) + (1.0 - ind) * jnp.log(nonevent_lik)  # (TN,1)

    # Mask rows of the ragged last tile (OOB rows hold unspecified data;
    # jnp.where does not propagate NaN/Inf from the unselected branch).
    row = jax.lax.broadcasted_iota(jnp.int32, (tn, 1), 0) + i * tn
    ll = jnp.where(row < n_rows, ll, 0.0)

    partial = jnp.sum(ll)
    # Lane-dense (1, 128) write of this tile's partial sum.
    out_ref[...] = jnp.full((1, 128), partial, dtype=jnp.float32)


def discrete_failure_time_nll(predictions, event_indicators, event_times,
                              bin_boundaries, *, tile_rows=2048):
    """predictions: (N, B+1) float, event_indicators: (N,), event_times: (N,),
    bin_boundaries: (B+1,).  Returns scalar f32 NLL."""
    n, bp1 = predictions.shape

    bb = bin_boundaries.astype(jnp.float32)
    starts = bb[:-1]
    ends = bb[1:]
    inv_lens = 1.0 / (ends - starts)

    # Pad bin parameters to B+1 columns with neutral values so the last
    # prediction column contributes exactly 0 to both reductions.
    big = jnp.float32(jnp.finfo(jnp.float32).max)
    starts_p = jnp.concatenate([starts, jnp.array([big], jnp.float32)])
    ends_p = jnp.concatenate([ends, jnp.array([big], jnp.float32)])
    inv_lens_p = jnp.concatenate([inv_lens, jnp.array([0.0], jnp.float32)])
    bins = jnp.stack([starts_p, ends_p, inv_lens_p], axis=0)        # (3, B+1)

    # Merge the two per-row scalars into one (N, 2) input.
    te = jnp.stack([event_times.astype(jnp.float32),
                    event_indicators.astype(jnp.float32)], axis=1)  # (N, 2)

    tn = min(tile_rows, _round_up(n, 8))
    num_tiles = pl.cdiv(n, tn)

    kernel = functools.partial(_dftnll_kernel, n_rows=n)

    bytes_accessed = int(predictions.size * predictions.dtype.itemsize
                         + te.size * 4 + bins.size * 4 + num_tiles * 128 * 4)

    partials = pl.pallas_call(
        kernel,
        out_shape=jax.ShapeDtypeStruct((num_tiles, 128), jnp.float32),
        grid=(num_tiles,),
        in_specs=[
            pl.BlockSpec((tn, bp1), lambda i: (i, 0)),   # predictions tile
            pl.BlockSpec((tn, 2), lambda i: (i, 0)),     # [times, indicators]
            pl.BlockSpec((3, bp1), lambda i: (0, 0)),    # bin params (resident)
        ],
        out_specs=pl.BlockSpec((1, 128), lambda i: (i, 0)),
        compiler_params=pltpu.CompilerParams(
            dimension_semantics=("parallel",)),
        cost_estimate=pl.CostEstimate(
            flops=6 * n * bp1,
            transcendentals=2 * n,
            bytes_accessed=bytes_accessed),
    )(predictions, te, bins)

    # Tiny epilogue: combine per-tile partial sums, take the mean, negate.
    return -jnp.sum(partials[:, 0]) / jnp.float32(n)


def _reference(predictions, event_indicators, event_times, bin_boundaries):
    starts = bin_boundaries[:-1]
    ends = bin_boundaries[1:]
    lens = ends - starts
    t = event_times[:, None]
    mask = ((t > starts[None, :]) & (t <= ends[None, :])).astype(jnp.float32)
    ev = jnp.sum(mask * predictions[:, :-1], -1) + TOLERANCE
    prop = jnp.clip((t - starts[None, :]) / lens[None, :], 0.0, 1.0)
    nev = 1.0 - jnp.sum(prop * predictions[:, :-1], -1) + TOLERANCE
    ll = event_indicators * jnp.log(ev) + (1.0 - event_indicators) * jnp.log(nev)
    return -jnp.mean(ll)


if __name__ == "__main__":
    key = jax.random.PRNGKey(0)
    k1, k2, k3 = jax.random.split(key, 3)

    # --- Small test (single tile) -------------------------------------------
    N = 8
    B = 16
    bin_boundaries = jnp.linspace(0.0, 10.0, B + 1, dtype=jnp.float32)

    logits = jax.random.normal(k1, (N, B + 1), dtype=jnp.float32)
    predictions = jax.nn.softmax(logits, axis=-1)
    event_times = jax.random.uniform(k2, (N,), minval=0.1, maxval=9.9,
                                     dtype=jnp.float32)
    event_indicators = (jax.random.uniform(k3, (N,)) > 0.5).astype(jnp.float32)

    loss = discrete_failure_time_nll(predictions, event_indicators,
                                     event_times, bin_boundaries)
    loss = jax.block_until_ready(loss)
    ref = _reference(predictions, event_indicators, event_times, bin_boundaries)
    assert jnp.allclose(loss, ref, rtol=1e-5, atol=1e-6), (loss, ref)

    # --- Multi-tile + ragged-last-tile test ---------------------------------
    N2 = 300
    k4, k5, k6 = jax.random.split(jax.random.PRNGKey(1), 3)
    logits2 = jax.random.normal(k4, (N2, B + 1), dtype=jnp.float32)
    predictions2 = jax.nn.softmax(logits2, axis=-1)
    event_times2 = jax.random.uniform(k5, (N2,), minval=0.1, maxval=9.9,
                                      dtype=jnp.float32)
    event_indicators2 = (jax.random.uniform(k6, (N2,)) > 0.5).astype(jnp.float32)

    loss2 = discrete_failure_time_nll(predictions2, event_indicators2,
                                      event_times2, bin_boundaries,
                                      tile_rows=128)
    loss2 = jax.block_until_ready(loss2)
    ref2 = _reference(predictions2, event_indicators2, event_times2,
                      bin_boundaries)
    assert jnp.allclose(loss2, ref2, rtol=1e-5, atol=1e-6), (loss2, ref2)

    print("KERNEL_OK")
</pallas_src>

<mosaic_0001>
module attributes {stable_mosaic.version = 11 : i64} {
  func.func @_dftnll_kernel(%arg0: i32, %arg1: memref<8x17xf32, #tpu.memory_space<vmem>>, %arg2: memref<8x2xf32, #tpu.memory_space<vmem>>, %arg3: memref<3x17xf32, #tpu.memory_space<vmem>>, %arg4: memref<1x128xf32, #tpu.memory_space<vmem>>) attributes {dimension_semantics = [#tpu.dimension_semantics<parallel>], iteration_bounds = array<i64: 1>, scalar_prefetch = 0 : i64, scratch_operands = 0 : i64, tpu.core_type = #tpu.core_type<tc>, window_params = [{transform_indices = @transform_0, window_bounds = array<i64: 8, 17>}, {transform_indices = @transform_1, window_bounds = array<i64: 8, 2>}, {pipeline_mode = #tpu.pipeline_mode<synchronous>, transform_indices = @transform_2, window_bounds = array<i64: 3, 17>}, {transform_indices = @transform_3, window_bounds = array<i64: 1, 128>}]} {
    %c0 = arith.constant 0 : index
    %c0_0 = arith.constant 0 : index
    %0 = vector.load %arg1[%c0, %c0_0] : memref<8x17xf32, #tpu.memory_space<vmem>>, vector<8x17xf32>
    %c0_1 = arith.constant 0 : index
    %c0_2 = arith.constant 0 : index
    %1 = vector.load %arg2[%c0_1, %c0_2] : memref<8x2xf32, #tpu.memory_space<vmem>>, vector<8x2xf32>
    %c0_3 = arith.constant 0 : index
    %c0_4 = arith.constant 0 : index
    %2 = vector.load %arg3[%c0_3, %c0_4] : memref<3x17xf32, #tpu.memory_space<vmem>>, vector<3x17xf32>
    %3 = vector.extract_strided_slice %1 {offsets = [0, 0], sizes = [8, 1], strides = [1, 1]} : vector<8x2xf32> to vector<8x1xf32>
    %4 = vector.extract_strided_slice %1 {offsets = [0, 1], sizes = [8, 1], strides = [1, 1]} : vector<8x2xf32> to vector<8x1xf32>
    %5 = vector.extract_strided_slice %2 {offsets = [0, 0], sizes = [1, 17], strides = [1, 1]} : vector<3x17xf32> to vector<1x17xf32>
    %6 = vector.extract_strided_slice %2 {offsets = [1, 0], sizes = [1, 17], strides = [1, 1]} : vector<3x17xf32> to vector<1x17xf32>
    %7 = vector.extract_strided_slice %2 {offsets = [2, 0], sizes = [1, 17], strides = [1, 1]} : vector<3x17xf32> to vector<1x17xf32>
    %8 = vector.broadcast %3 : vector<8x1xf32> to vector<8x17xf32>
    %9 = vector.broadcast %5 : vector<1x17xf32> to vector<8x17xf32>
    %10 = arith.cmpf ogt, %8, %9 : vector<8x17xf32>
    %11 = vector.broadcast %3 : vector<8x1xf32> to vector<8x17xf32>
    %12 = vector.broadcast %6 : vector<1x17xf32> to vector<8x17xf32>
    %13 = arith.cmpf ole, %11, %12 : vector<8x17xf32>
    %14 = arith.andi %10, %13 : vector<8x17xi1>
    %15 = arith.extui %14 : vector<8x17xi1> to vector<8x17xi32>
    %16 = arith.sitofp %15 : vector<8x17xi32> to vector<8x17xf32>
    %17 = arith.mulf %16, %0 : vector<8x17xf32>
    %cst = arith.constant dense<0.000000e+00> : vector<8xf32>
    %18 = vector.multi_reduction <add>, %17, %cst [1] : vector<8x17xf32> to vector<8xf32>
    %19 = vector.shape_cast %18 : vector<8xf32> to vector<8x1xf32>
    %cst_5 = arith.constant 9.99999993E-9 : f32
    %20 = vector.broadcast %cst_5 : f32 to vector<8x1xf32>
    %21 = arith.addf %19, %20 : vector<8x1xf32>
    %22 = vector.broadcast %3 : vector<8x1xf32> to vector<8x17xf32>
    %23 = vector.broadcast %5 : vector<1x17xf32> to vector<8x17xf32>
    %24 = arith.subf %22, %23 : vector<8x17xf32>
    %25 = vector.broadcast %7 : vector<1x17xf32> to vector<8x17xf32>
    %26 = arith.mulf %24, %25 : vector<8x17xf32>
    %cst_6 = arith.constant 0.000000e+00 : f32
    %cst_7 = arith.constant 1.000000e+00 : f32
    %27 = vector.broadcast %cst_6 : f32 to vector<8x17xf32>
    %28 = arith.maximumf %27, %26 : vector<8x17xf32>
    %29 = vector.broadcast %cst_7 : f32 to vector<8x17xf32>
    %30 = arith.minimumf %29, %28 : vector<8x17xf32>
    %31 = arith.mulf %30, %0 : vector<8x17xf32>
    %cst_8 = arith.constant dense<0.000000e+00> : vector<8xf32>
    %32 = vector.multi_reduction <add>, %31, %cst_8 [1] : vector<8x17xf32> to vector<8xf32>
    %33 = vector.shape_cast %32 : vector<8xf32> to vector<8x1xf32>
    %cst_9 = arith.constant 1.000000e+00 : f32
    %34 = vector.broadcast %cst_9 : f32 to vector<8x1xf32>
    %35 = arith.subf %34, %33 : vector<8x1xf32>
    %cst_10 = arith.constant 9.99999993E-9 : f32
    %36 = vector.broadcast %cst_10 : f32 to vector<8x1xf32>
    %37 = arith.addf %35, %36 : vector<8x1xf32>
    %38 = math.log %21 : vector<8x1xf32>
    %39 = arith.mulf %4, %38 : vector<8x1xf32>
    %cst_11 = arith.constant 1.000000e+00 : f32
    %40 = vector.broadcast %cst_11 : f32 to vector<8x1xf32>
    %41 = arith.subf %40, %4 : vector<8x1xf32>
    %42 = math.log %37 : vector<8x1xf32>
    %43 = arith.mulf %41, %42 : vector<8x1xf32>
    %44 = arith.addf %39, %43 : vector<8x1xf32>
    %45 = tpu.iota {dimensions = array<i32: 0>} : vector<8x1xi32>
    %c8_i32 = arith.constant 8 : i32
    %46 = arith.muli %arg0, %c8_i32 : i32
    %47 = vector.broadcast %46 : i32 to vector<8x1xi32>
    %48 = arith.addi %45, %47 : vector<8x1xi32>
    %c8_i32_12 = arith.constant 8 : i32
    %49 = vector.broadcast %c8_i32_12 : i32 to vector<8x1xi32>
    %50 = arith.cmpi slt, %48, %49 : vector<8x1xi32>
    %cst_13 = arith.constant 0.000000e+00 : f32
    %51 = vector.broadcast %cst_13 : f32 to vector<8x1xf32>
    %52 = arith.select %50, %44, %51 : vector<8x1xi1>, vector<8x1xf32>
    %53 = vector.shape_cast %52 : vector<8x1xf32> to vector<1x8x1xf32>
    %cst_14 = arith.constant dense<0.000000e+00> : vector<1xf32>
    %54 = vector.multi_reduction <add>, %53, %cst_14 [1, 2] : vector<1x8x1xf32> to vector<1xf32>
    %55 = vector.shape_cast %54 : vector<1xf32> to vector<1x1x1xf32>
    %56 = vector.extract %55[0, 0, 0] : f32 from vector<1x1x1xf32>
    %57 = vector.broadcast %56 : f32 to vector<1x128xf32>
    %c0_15 = arith.constant 0 : index
    %c0_16 = arith.constant 0 : index
    %58 = vector.load %arg4[%c0_15, %c0_16] : memref<1x128xf32, #tpu.memory_space<vmem>>, vector<1x128xf32>
    tpu.vector_store %arg4[%c0_15, %c0_16], %57 {strides = array<i32>} : memref<1x128xf32, #tpu.memory_space<vmem>>, vector<1x128xf32>,
    return
  }
  func.func @transform_0(%arg0: i32) -> (i32, i32) {
    %c0_i32 = arith.constant 0 : i32
    %c0_i32_0 = arith.constant 0 : i32
    return %arg0, %c0_i32 : i32, i32
  }
  func.func @transform_1(%arg0: i32) -> (i32, i32) {
    %c0_i32 = arith.constant 0 : i32
    %c0_i32_0 = arith.constant 0 : i32
    return %arg0, %c0_i32 : i32, i32
  }
  func.func @transform_2(%arg0: i32) -> (i32, i32) {
    %c0_i32 = arith.constant 0 : i32
    %c0_i32_0 = arith.constant 0 : i32
    %c0_i32_1 = arith.constant 0 : i32
    return %c0_i32, %c0_i32_0 : i32, i32
  }
  func.func @transform_3(%arg0: i32) -> (i32, i32) {
    %c0_i32 = arith.constant 0 : i32
    %c0_i32_0 = arith.constant 0 : i32
    return %arg0, %c0_i32 : i32, i32
  }
}

</mosaic_0001>

<llo_original>
// kernel: tpu_custom_call.1
$region0: #{tpu_custom_call.1}
  #allocation0 [shape = 'u32[]', space=smem, size = 0x4, offset = 0x4, fixed_abs, tag = 'smem constant byte address 0x4 - core index']
  #allocation1 [shape = 'u32[72,128]{1,0:T(1,128)}', space=vmem, size = 0x9000, scoped, tag = 'internal scratch']
  %s0 = inlined_call_operand.vmem [shape: f32[8,17], index: 0, kind: input, shape index: {}]
  %s1 = inlined_call_operand.vmem [shape: f32[8,2], index: 1, kind: input, shape index: {}]
  %s2 = inlined_call_operand.hbm [shape: f32[3,17], index: 2, kind: input, shape index: {}]
  %s3 = inlined_call_operand.hbm [shape: f32[1,128], index: 3, kind: output, shape index: {}]
  %s4 = sld [smem:[#allocation0]]
  $region26: #{tpu_custom_call.1} parent=0
    _
  %s6 = ssub.s32 1, %s4
  %s7 = scalar_select 0, %s6, %s4
  $region1: #{tpu_custom_call.1} parent=0
    #allocation2 [shape = 'u8[2048]{0}', space=vmem, size = 0x800, scoped, tag = 'input window, operand 2, single buffered']
    #allocation3 [shape = 's32[1]{0}', space=sflag, size = 0x4, scoped, tag = 'scoped memory for tpu_custom_call.1']
    #allocation4 [shape = 's32[1]{0}', space=sflag, size = 0x4, scoped, tag = 'scoped memory for tpu_custom_call.1']
    #allocation5 [shape = 'u8[512]{0}', space=vmem, size = 0x400, scoped, tag = 'output window, operand 0, single buffered']
    %8 = vsyncpa [#allocation3], 0
    %9 = vsyncpa [#allocation4], 0
    // Predicated region
    $region2: #{tpu_custom_call.1} parent=1 // pred_check
      _
    $region3: #{tpu_custom_call.1} parent=1 // pred_check_branch
      %11 = sbr.rel (0) target = $region5
    $region4: #{tpu_custom_call.1} parent=1 // pred_region
      _
    $region5: #{tpu_custom_call.1} parent=1 // pred_fallthru
      _
    // Predicated region
    $region6: #{tpu_custom_call.1} parent=1 // pred_check
      _
    $region7: #{tpu_custom_call.1} parent=1 // pred_check_branch
      %13 = sbr.rel (0) target = $region9
    $region8: #{tpu_custom_call.1} parent=1 // pred_region
      _
    $region9: #{tpu_custom_call.1} parent=1 // pred_fallthru
      _
    // Predicated region
    $region10: #{tpu_custom_call.1} parent=1 // pred_check
      _
    $region11: #{tpu_custom_call.1} parent=1 // pred_check_branch
      %15 = sbr.rel (0) target = $region13
    $region12: #{tpu_custom_call.1} parent=1 // pred_region
      %17 = vsyncadd [#allocation3], 0
      %s19 = sshll.u32 %s2, 4
      %s20 = int_to_ptr.hbm [resolvable:$true] %s19
      %s21 = sshll.u32 [#allocation2], 4
      %s22 = int_to_ptr.vmem [resolvable:$true] %s21
      %24 = dma.hbm_to_vmem [thread:$0]  %s20, 64, %s22, [#allocation3]
    $region13: #{tpu_custom_call.1} parent=1 // pred_fallthru
      _
    // Predicated region
    $region14: #{tpu_custom_call.1} parent=1 // pred_check
      _
    $region15: #{tpu_custom_call.1} parent=1 // pred_check_branch
      %26 = sbr.rel (0) target = $region17
    $region16: #{tpu_custom_call.1} parent=1 // pred_region
      %28 = dma.done [#allocation3], 64
    $region17: #{tpu_custom_call.1} parent=1 // pred_fallthru
      _
    %v29 = vld [vmem:[%s0] sm:$0xff]
    %v30 = vld [vmem:[%s1] sm:$0xff]
    %v31 = vld [vmem:[#allocation2] sm:$0x7]
    %33 = vset.pattern.permute.xlu0 0
    %34 = vperm.xlu0 %33, %v30
    %v35 = vpop.permute.xlu0 %34
    %v37 = vperm.slane %v31, 0
    %vm38 = vcmp.gt.f32.partialorder %v35, %v37
    %v39 = vperm.slane %v31, 1
    %vm40 = vcmp.le.f32.partialorder %v35, %v39
    %vm41 = vmand %vm38, %vm40
    %v42 = vsel %vm41, 1, 0
    %v43 = vcvt.s32.f32 %v42
    %v44 = vmul.f32 %v43, %v29
    %vm45 = vcmask 138240
    %v46 = vsel %vm45, %v44, 0.0
    %47 = vadd.xlane.f32.xlu0 %v46
    %v48 = vpop.xlane.xlu0 %47
    %v49 = vadd.f32 %v48, 1e-08
    %v50 = vsub.f32 %v35, %v37
    %v51 = vperm.slane %v31, 2
    %v52 = vmul.f32 %v50, %v51
    %v53 = vmax.f32 %v52, 0.0
    %v54 = vmin.f32 %v53, 1.0
    %v55 = vmul.f32 %v54, %v29
    %v56 = vsel %vm45, %v55, 0.0
    %57 = vadd.xlane.f32.xlu0 %v56
    %v58 = vpop.xlane.xlu0 %57
    %v59 = vsub.f32 1.0, %v58
    %v60 = vadd.f32 %v59, 1e-08
    %v61 = vlog2.pop %v49
    %v62 = vmul.f32 %v61, 0.6931472
    %v63 = vmul.f32 %v30, %v62
    %v64 = vsub.f32 1.0, %v30
    %v65 = vlog2.pop %v60
    %v66 = vmul.f32 %v65, 0.6931472
    %v67 = vmul.f32 %v64, %v66
    %v68 = vadd.f32 %v63, %v67
    %v69 = vlaneseq
    %v70 = vshrl.u32 %v69, 7
    %s71 = smul.u32 0, 8
    %v72 = vstv %s71
    %v73 = vadd.s32 %v70, %v72
    %vm74 = vcmp.lt.s32.totalorder %v73, 8
    %v75 = vsel %vm74, %v68, 0.0
    %77 = vrot.lane.b32.xlu0 %v75, 127
    %v78 = vpop.permute.xlu0 %77
    %vm80 = vcmask 7168
    %v81 = vsel %vm80, %v78, 0.0
    %82 = vadd.xlane.f32.xlu0 %v81
    %v83 = vpop.xlane.xlu0 %82
    %v84 = vrot.slane %v83, 4
    %v85 = vadd.f32 %v83, %v84
    %v86 = vrot.slane %v85, 2
    %v87 = vadd.f32 %v85, %v86
    %v88 = vrot.slane %v87, 1
    %v89 = vadd.f32 %v87, %v88
    %s90 = vtos %v89
    %v91 = vstv %s90
    %92 = vst [vmem:[#allocation5] sm:$0x1] %v91
    // Predicated region
    $region18: #{tpu_custom_call.1} parent=1 // pred_check
      _
    $region19: #{tpu_custom_call.1} parent=1 // pred_check_branch
      %94 = sbr.rel (0) target = $region21
    $region20: #{tpu_custom_call.1} parent=1 // pred_region
      %96 = vsyncadd [#allocation4], 0
      %s98 = sshll.u32 [#allocation5], 4
      %s99 = int_to_ptr.vmem [resolvable:$true] %s98
      %s100 = sshll.u32 %s3, 4
      %s101 = int_to_ptr.hbm [resolvable:$true] %s100
      %103 = dma.vmem_to_hbm [thread:$0]  %s99, 16, %s101, [#allocation4]
    $region21: #{tpu_custom_call.1} parent=1 // pred_fallthru
      _
    // Predicated region
    $region22: #{tpu_custom_call.1} parent=1 // pred_check
      _
    $region23: #{tpu_custom_call.1} parent=1 // pred_check_branch
      %105 = sbr.rel (0) target = $region25
    $region24: #{tpu_custom_call.1} parent=1 // pred_region
      %107 = dma.done [#allocation4], 16
    $region25: #{tpu_custom_call.1} parent=1 // pred_fallthru
      _
    %108 = vsyncpa [#allocation3], 1
    %109 = vsyncpa [#allocation4], 1

</llo_original>
